<compile_context>
chip_gen: v6e
topology: v6e:2x2x1
jax: 0.10.0
libtpu: 0.0.40
codegen_flags: <defaults>
</compile_context>

<pallas_src>
import math

import jax
import jax.numpy as jnp
from jax.experimental import pallas as pl
from jax.experimental.pallas import tpu as pltpu


def _round_up(x, m):
    return ((x + m - 1) // m) * m


def _cdiv(a, b):
    return (a + b - 1) // b


def _vmem_capacity_bytes():
    """Per-core VMEM capacity; conservative 64 MiB (v7x) fallback."""
    try:
        cap = getattr(pltpu.get_tpu_info(), "vmem_capacity_bytes", None)
        if cap:
            return int(min(max(int(cap), 32 * 1024 * 1024), 128 * 1024 * 1024))
    except Exception:
        pass
    return 64 * 1024 * 1024


def _row_tiling(M, tm_target):
    """Row tile size + #row tiles with at most ~8*grid_rows padded rows."""
    grid_rows = max(_cdiv(M, tm_target), 1)
    if grid_rows == 1 and M > 8:
        grid_rows = 2          # keep both v7x TensorCores busy
    tm = _round_up(_cdiv(M, grid_rows), 8)
    return tm, grid_rows


def _estimate_vmem(tm, tk, d_pad, dff_pad, itm, out_itm, resident, acc_in_out):
    est = 2 * tm * d_pad * itm                 # x tiles (double-buffered)
    est += 2 * tm * d_pad * out_itm            # out tiles (double-buffered)
    if not acc_in_out:
        est += tm * d_pad * 4                  # f32 accumulator scratch
    est += tm * tk * (4 + itm)                 # h (f32) + cast-to-compute copy
    if resident:
        est += 2 * 2 * d_pad * dff_pad * itm   # W1 + W2, counted double-buffered
        est += 2 * d_pad * tk * itm            # in-kernel weight-slab slices
        est += 2 * 8 * (dff_pad + d_pad) * 4   # biases (sublane-padded)
    else:
        est += 2 * 2 * d_pad * tk * itm        # streamed W1 + W2 slabs
        est += 2 * 8 * (tk + d_pad) * 4
    return est


def _choose_tiles(M, d_pad, dff_pad, tk, itm, out_itm, acc_in_out, budget, tm_max):
    cands = sorted({t for t in (tm_max, 1024, 512, 256, 128, 64, 32, 16, 8)
                    if 8 <= t <= max(tm_max, 8)}, reverse=True)
    for resident in (True, False):             # prefer weight-resident (1x HBM weight read)
        for tm_target in cands:
            tm, grid_rows = _row_tiling(M, tm_target)
            est = _estimate_vmem(tm, tk, d_pad, dff_pad, itm, out_itm,
                                 resident, acc_in_out)
            if est <= budget:
                return resident, tm, grid_rows, est
    tm, grid_rows = _row_tiling(M, 8)
    return False, tm, grid_rows, _estimate_vmem(tm, tk, d_pad, dff_pad, itm,
                                                out_itm, False, acc_in_out)


def _make_ffn_kernel(tk, resident, acc_in_out):
    def kernel(x_ref, w1_ref, b1_ref, w2_ref, b2_ref, o_ref, *scratch):
        k = pl.program_id(1)
        acc_ref = o_ref if acc_in_out else scratch[0]

        @pl.when(k == 0)
        def _():
            acc_ref[...] = jnp.zeros_like(acc_ref)

        if resident:
            # Weights live in VMEM for the whole grid; slice the current dff slab.
            off = pl.multiple_of(k * tk, 128)
            w1s = w1_ref[:, pl.ds(off, tk)]
            b1s = b1_ref[:, pl.ds(off, tk)]
            w2s = w2_ref[pl.ds(off, tk), :]
        else:
            w1s = w1_ref[...]
            b1s = b1_ref[...]
            w2s = w2_ref[...]

        # First matmul on this dff slab; bias + ReLU in f32.
        h = jnp.dot(x_ref[...], w1s, preferred_element_type=jnp.float32)
        h = jnp.maximum(h + b1s, 0.0)
        # TODO(synk): dropout has p=0.0 in the reference module, i.e. exact identity.

        # Partial second matmul accumulated in f32.
        acc_ref[...] += jnp.dot(h.astype(w2s.dtype), w2s,
                                preferred_element_type=jnp.float32)

        @pl.when(k == pl.num_programs(1) - 1)
        def _():
            if acc_in_out:
                o_ref[...] += b2_ref[...]
            else:
                o_ref[...] = (acc_ref[...] + b2_ref[...]).astype(o_ref.dtype)

    return kernel


def prepare_ffn_params(w1, b1, w2, b2, *, compute_dtype=jnp.bfloat16, tk_max=512):
    """One-time pad + cast of the FFN parameters (hoisted out of the forward)."""
    d_model, dff = w1.shape
    assert w2.shape == (dff, d_model)
    d_pad = _round_up(d_model, 128)
    tk = min(tk_max, _round_up(dff, 128))
    dff_pad = _round_up(dff, tk)
    return dict(
        w1=jnp.pad(w1.astype(compute_dtype),
                   ((0, d_pad - d_model), (0, dff_pad - dff))),
        w2=jnp.pad(w2.astype(compute_dtype),
                   ((0, dff_pad - dff), (0, d_pad - d_model))),
        b1=jnp.pad(b1.astype(jnp.float32), (0, dff_pad - dff)).reshape(1, dff_pad),
        b2=jnp.pad(b2.astype(jnp.float32), (0, d_pad - d_model)).reshape(1, d_pad),
        d_model=d_model, dff=dff, d_pad=d_pad, dff_pad=dff_pad, tk=tk,
        compute_dtype=jnp.dtype(compute_dtype),
    )


def feed_forward(x, params, *, tm_max=None):
    """x: (batch, seq, d_model) -> (batch, seq, d_model)."""
    batch, seq, d_model = x.shape
    assert d_model == params["d_model"]
    out_dtype = x.dtype
    compute_dtype = params["compute_dtype"]
    d_pad, dff_pad, tk = params["d_pad"], params["dff_pad"], params["tk"]
    itm = jnp.dtype(compute_dtype).itemsize
    out_itm = jnp.dtype(out_dtype).itemsize
    acc_in_out = jnp.dtype(out_dtype) == jnp.dtype(jnp.float32)

    M = batch * seq

    # ---- Per-generation VMEM budget (v5e/v6e: 128 MiB, v7x: 64 MiB). ----
    cap = _vmem_capacity_bytes()
    budget = min(int(cap * 0.85), 112 * 1024 * 1024)     # leave headroom under cap
    if tm_max is None:
        tm_max = 512 if cap <= 80 * 1024 * 1024 else 1024

    resident, tm, grid_rows, est = _choose_tiles(
        M, d_pad, dff_pad, tk, itm, out_itm, acc_in_out, budget, tm_max)

    M_pad = tm * grid_rows
    grid_k = dff_pad // tk
    vmem_limit = int(min(max(est * 3 // 2, 32 * 1024 * 1024), budget))

    x2d = jnp.pad(x.reshape(M, d_model).astype(compute_dtype),
                  ((0, M_pad - M), (0, d_pad - d_model)))

    if resident:
        w1_spec = pl.BlockSpec((d_pad, dff_pad), lambda i, k: (0, 0))
        b1_spec = pl.BlockSpec((1, dff_pad), lambda i, k: (0, 0))
        w2_spec = pl.BlockSpec((dff_pad, d_pad), lambda i, k: (0, 0))
    else:
        w1_spec = pl.BlockSpec((d_pad, tk), lambda i, k: (0, k))
        b1_spec = pl.BlockSpec((1, tk), lambda i, k: (0, k))
        w2_spec = pl.BlockSpec((tk, d_pad), lambda i, k: (k, 0))

    weight_bytes = (params["w1"].size + params["w2"].size) * itm
    weight_reads = 1 if resident else grid_rows
    cost = pl.CostEstimate(
        flops=4 * M_pad * d_pad * dff_pad,                 # two matmuls
        transcendentals=0,
        bytes_accessed=int(x2d.size * itm
                           + weight_bytes * weight_reads
                           + M_pad * d_pad * out_itm
                           + (params["b1"].size + params["b2"].size) * 4),
    )

    out = pl.pallas_call(
        _make_ffn_kernel(tk=tk, resident=resident, acc_in_out=acc_in_out),
        out_shape=jax.ShapeDtypeStruct((M_pad, d_pad), out_dtype),
        grid_spec=pltpu.PrefetchScalarGridSpec(
            num_scalar_prefetch=0,
            grid=(grid_rows, grid_k),
            in_specs=[
                pl.BlockSpec((tm, d_pad), lambda i, k: (i, 0)),   # x rows
                w1_spec, b1_spec, w2_spec,
                pl.BlockSpec((1, d_pad), lambda i, k: (0, 0)),    # b2 (resident)
            ],
            out_specs=pl.BlockSpec((tm, d_pad), lambda i, k: (i, 0)),
            scratch_shapes=([] if acc_in_out
                            else [pltpu.VMEM((tm, d_pad), jnp.float32)]),
        ),
        compiler_params=pltpu.CompilerParams(
            dimension_semantics=("parallel", "arbitrary"),
            vmem_limit_bytes=vmem_limit,
        ),
        cost_estimate=cost,
    )(x2d, params["w1"], params["b1"], params["w2"], params["b2"])

    return out[:M, :d_model].reshape(batch, seq, d_model)


def init_linear_params(key, fan_in, fan_out, dtype=jnp.float32):
    # Deterministic init mimicking torch.nn.Linear defaults.
    kw, kb = jax.random.split(key)
    bound = 1.0 / math.sqrt(fan_in)
    w = jax.random.uniform(kw, (fan_in, fan_out), dtype, -bound, bound)
    b = jax.random.uniform(kb, (fan_out,), dtype, -bound, bound)
    return w, b


if __name__ == "__main__":
    d_model = 32
    dim_feedforward = 128
    batch, seq = 2, 8

    key = jax.random.PRNGKey(0)
    kx, k1, k2 = jax.random.split(key, 3)

    x = jax.random.normal(kx, (batch, seq, d_model), jnp.float32)
    w1, b1 = init_linear_params(k1, d_model, dim_feedforward)
    w2, b2 = init_linear_params(k2, dim_feedforward, d_model)

    # Plain-JAX reference of the module's forward (dropout p=0.0 -> identity).
    y_ref = jnp.maximum(x @ w1 + b1, 0.0) @ w2 + b2

    # Exact-f32 path (matches reference semantics tightly).
    params_f32 = prepare_ffn_params(w1, b1, w2, b2, compute_dtype=jnp.float32)
    y = feed_forward(x, params_f32)
    jax.block_until_ready(y)
    assert jnp.allclose(y, y_ref, atol=1e-5, rtol=1e-5)

    # Default bf16 MXU path (f32 accumulation); looser tolerance.
    params_bf16 = prepare_ffn_params(w1, b1, w2, b2)   # compute_dtype=bfloat16
    y_bf16 = feed_forward(x, params_bf16)
    jax.block_until_ready(y_bf16)
    assert jnp.allclose(y_bf16, y_ref, atol=5e-2, rtol=5e-2)

    print("KERNEL_OK")
</pallas_src>

<mosaic_0001>
module attributes {stable_mosaic.version = 11 : i64} {
  func.func @kernel(%arg0: i32, %arg1: i32, %arg2: memref<8x128xf32, #tpu.memory_space<vmem>>, %arg3: memref<128x128xf32, #tpu.memory_space<vmem>>, %arg4: memref<1x128xf32, #tpu.memory_space<vmem>>, %arg5: memref<128x128xf32, #tpu.memory_space<vmem>>, %arg6: memref<1x128xf32, #tpu.memory_space<vmem>>, %arg7: memref<8x128xf32, #tpu.memory_space<vmem>>) attributes {dimension_semantics = [#tpu.dimension_semantics<parallel>, #tpu.dimension_semantics<arbitrary>], iteration_bounds = array<i64: 2, 1>, scalar_prefetch = 0 : i64, scratch_operands = 0 : i64, tpu.core_type = #tpu.core_type<tc>, window_params = [{transform_indices = @transform_0, window_bounds = array<i64: 8, 128>}, {pipeline_mode = #tpu.pipeline_mode<synchronous>, transform_indices = @transform_1, window_bounds = array<i64: 128, 128>}, {pipeline_mode = #tpu.pipeline_mode<synchronous>, transform_indices = @transform_2, window_bounds = array<i64: 1, 128>}, {pipeline_mode = #tpu.pipeline_mode<synchronous>, transform_indices = @transform_3, window_bounds = array<i64: 128, 128>}, {pipeline_mode = #tpu.pipeline_mode<synchronous>, transform_indices = @transform_4, window_bounds = array<i64: 1, 128>}, {transform_indices = @transform_5, window_bounds = array<i64: 8, 128>}]} {
    %c0_i32 = arith.constant 0 : i32
    %0 = arith.cmpi eq, %arg1, %c0_i32 : i32
    %1 = arith.extui %0 : i1 to i32
    %c0_i32_0 = arith.constant 0 : i32
    %2 = arith.cmpi ne, %1, %c0_i32_0 : i32
    scf.if %2 {
      %cst_13 = arith.constant 0.000000e+00 : f32
      %24 = vector.broadcast %cst_13 : f32 to vector<8x128xf32>
      %c0_14 = arith.constant 0 : index
      %c0_15 = arith.constant 0 : index
      %25 = vector.load %arg7[%c0_14, %c0_15] : memref<8x128xf32, #tpu.memory_space<vmem>>, vector<8x128xf32>
      tpu.vector_store %arg7[%c0_14, %c0_15], %24 {strides = array<i32>} : memref<8x128xf32, #tpu.memory_space<vmem>>, vector<8x128xf32>,
    } else {
    }
    %c128_i32 = arith.constant 128 : i32
    %3 = arith.muli %arg1, %c128_i32 : i32
    %4 = tpu.assume_multiple %3, 128 : i32
    %c0 = arith.constant 0 : index
    %5 = arith.index_cast %4 : i32 to index
    %6 = vector.load %arg3[%c0, %5] : memref<128x128xf32, #tpu.memory_space<vmem>>, vector<128x128xf32>
    %c0_1 = arith.constant 0 : index
    %7 = arith.index_cast %4 : i32 to index
    %8 = vector.load %arg4[%c0_1, %7] : memref<1x128xf32, #tpu.memory_space<vmem>>, vector<1x128xf32>
    %9 = arith.index_cast %4 : i32 to index
    %c0_2 = arith.constant 0 : index
    %10 = vector.load %arg5[%9, %c0_2] : memref<128x128xf32, #tpu.memory_space<vmem>>, vector<128x128xf32>
    %c0_3 = arith.constant 0 : index
    %c0_4 = arith.constant 0 : index
    %11 = vector.load %arg2[%c0_3, %c0_4] : memref<8x128xf32, #tpu.memory_space<vmem>>, vector<8x128xf32>
    %cst = arith.constant dense<0.000000e+00> : vector<8x128xf32>
    %12 = tpu.matmul %11, %6, %cst {dimension_numbers = #tpu.dot_dimension_numbers<[1], [0], [0], [1], [0, 0, 1, 1], [], []>} : vector<8x128xf32>, vector<128x128xf32>, vector<8x128xf32> -> vector<8x128xf32>
    %13 = vector.broadcast %8 : vector<1x128xf32> to vector<8x128xf32>
    %14 = arith.addf %12, %13 : vector<8x128xf32>
    %cst_5 = arith.constant 0.000000e+00 : f32
    %15 = vector.broadcast %cst_5 : f32 to vector<8x128xf32>
    %16 = arith.maximumf %14, %15 : vector<8x128xf32>
    %c0_6 = arith.constant 0 : index
    %c0_7 = arith.constant 0 : index
    %17 = vector.load %arg7[%c0_6, %c0_7] : memref<8x128xf32, #tpu.memory_space<vmem>>, vector<8x128xf32>
    %cst_8 = arith.constant dense<0.000000e+00> : vector<8x128xf32>
    %18 = tpu.matmul %16, %10, %cst_8 {dimension_numbers = #tpu.dot_dimension_numbers<[1], [0], [0], [1], [0, 0, 1, 1], [], []>} : vector<8x128xf32>, vector<128x128xf32>, vector<8x128xf32> -> vector<8x128xf32>
    %19 = arith.addf %17, %18 : vector<8x128xf32>
    %c0_9 = arith.constant 0 : index
    %c0_10 = arith.constant 0 : index
    %20 = vector.load %arg7[%c0_9, %c0_10] : memref<8x128xf32, #tpu.memory_space<vmem>>, vector<8x128xf32>
    tpu.vector_store %arg7[%c0_9, %c0_10], %19 {strides = array<i32>} : memref<8x128xf32, #tpu.memory_space<vmem>>, vector<8x128xf32>,
    %c0_i32_11 = arith.constant 0 : i32
    %21 = arith.cmpi eq, %arg1, %c0_i32_11 : i32
    %22 = arith.extui %21 : i1 to i32
    %c0_i32_12 = arith.constant 0 : i32
    %23 = arith.cmpi ne, %22, %c0_i32_12 : i32
    scf.if %23 {
      %c0_13 = arith.constant 0 : index
      %c0_14 = arith.constant 0 : index
      %24 = vector.load %arg7[%c0_13, %c0_14] : memref<8x128xf32, #tpu.memory_space<vmem>>, vector<8x128xf32>
      %c0_15 = arith.constant 0 : index
      %c0_16 = arith.constant 0 : index
      %25 = vector.load %arg6[%c0_15, %c0_16] : memref<1x128xf32, #tpu.memory_space<vmem>>, vector<1x128xf32>
      %26 = vector.broadcast %25 : vector<1x128xf32> to vector<8x128xf32>
      %27 = arith.addf %24, %26 : vector<8x128xf32>
      %c0_17 = arith.constant 0 : index
      %c0_18 = arith.constant 0 : index
      %28 = vector.load %arg7[%c0_17, %c0_18] : memref<8x128xf32, #tpu.memory_space<vmem>>, vector<8x128xf32>
      tpu.vector_store %arg7[%c0_17, %c0_18], %27 {strides = array<i32>} : memref<8x128xf32, #tpu.memory_space<vmem>>, vector<8x128xf32>,
    } else {
    }
    return
  }
  func.func @transform_0(%arg0: i32, %arg1: i32) -> (i32, i32) {
    %c0_i32 = arith.constant 0 : i32
    %c0_i32_0 = arith.constant 0 : i32
    return %arg0, %c0_i32 : i32, i32
  }
  func.func @transform_1(%arg0: i32, %arg1: i32) -> (i32, i32) {
    %c0_i32 = arith.constant 0 : i32
    %c0_i32_0 = arith.constant 0 : i32
    %c0_i32_1 = arith.constant 0 : i32
    return %c0_i32, %c0_i32_0 : i32, i32
  }
  func.func @transform_2(%arg0: i32, %arg1: i32) -> (i32, i32) {
    %c0_i32 = arith.constant 0 : i32
    %c0_i32_0 = arith.constant 0 : i32
    %c0_i32_1 = arith.constant 0 : i32
    return %c0_i32, %c0_i32_0 : i32, i32
  }
  func.func @transform_3(%arg0: i32, %arg1: i32) -> (i32, i32) {
    %c0_i32 = arith.constant 0 : i32
    %c0_i32_0 = arith.constant 0 : i32
    %c0_i32_1 = arith.constant 0 : i32
    return %c0_i32, %c0_i32_0 : i32, i32
  }
  func.func @transform_4(%arg0: i32, %arg1: i32) -> (i32, i32) {
    %c0_i32 = arith.constant 0 : i32
    %c0_i32_0 = arith.constant 0 : i32
    %c0_i32_1 = arith.constant 0 : i32
    return %c0_i32, %c0_i32_0 : i32, i32
  }
  func.func @transform_5(%arg0: i32, %arg1: i32) -> (i32, i32) {
    %c0_i32 = arith.constant 0 : i32
    %c0_i32_0 = arith.constant 0 : i32
    return %arg0, %c0_i32 : i32, i32
  }
}

</mosaic_0001>

<llo_original>
// kernel: tpu_custom_call.1
$region0: #{tpu_custom_call.1}
  #allocation0 [shape = 'u32[]', space=smem, size = 0x4, offset = 0x4, fixed_abs, tag = 'smem constant byte address 0x4 - core index']
  #allocation1 [shape = 'u32[144,128]{1,0:T(1,128)}', space=vmem, size = 0x12000, scoped, tag = 'internal scratch']
  %s0 = inlined_call_operand.hbm [shape: f32[16,128], index: 0, kind: input, shape index: {}]
  %s1 = inlined_call_operand.hbm [shape: f32[128,128], index: 1, kind: input, shape index: {}]
  %s2 = inlined_call_operand.vmem [shape: f32[1,128], index: 2, kind: input, shape index: {}]
  %s3 = inlined_call_operand.hbm [shape: f32[128,128], index: 3, kind: input, shape index: {}]
  %s4 = inlined_call_operand.vmem [shape: f32[1,128], index: 4, kind: input, shape index: {}]
  %s5 = inlined_call_operand.hbm [shape: f32[16,128], index: 5, kind: output, shape index: {}]
  %s6 = sld [smem:[#allocation0]]
  $region73: #{tpu_custom_call.1} parent=0
    _
  %s8 = ssub.s32 1, %s6
  %s9 = scalar_select 0, %s8, %s6
  $region1: #{tpu_custom_call.1} parent=0
    #allocation2 [shape = 'u8[8192]{0}', space=vmem, size = 0x2000, scoped, tag = 'input window, operand 0']
    #allocation3 [shape = 's32[2]{0}', space=sflag, size = 0x8, scoped, tag = 'scoped memory for tpu_custom_call.1']
    #allocation4 [shape = 's32[2]{0}', space=sflag, size = 0x8, scoped, tag = 'scoped memory for tpu_custom_call.1']
    #allocation5 [shape = 'u8[65536]{0}', space=vmem, size = 0x10000, scoped, tag = 'input window, operand 1, single buffered']
    #allocation6 [shape = 's32[1]{0}', space=sflag, size = 0x4, scoped, tag = 'scoped memory for tpu_custom_call.1']
    #allocation7 [shape = 'u8[65536]{0}', space=vmem, size = 0x10000, scoped, tag = 'input window, operand 3, single buffered']
    #allocation8 [shape = 'u8[8192]{0}', space=vmem, size = 0x2000, scoped, tag = 'output window, operand 0']
    %10 = vsyncpa [#allocation3], 0
    %s11 = scalar_lea.sflag [#allocation3], 1
    %12 = vsyncpa %s11, 0
    %13 = vsyncpa [#allocation6], 0
    %14 = vsyncpa [#allocation4], 0
    %s15 = scalar_lea.sflag [#allocation4], 1
    %16 = vsyncpa %s15, 0
    loop: start=0, step=1, limit=4
    $region2: #{tpu_custom_call.1} parent=1 // loop_pre_header
      _
    $region3: #{tpu_custom_call.1} parent=1 // loop_header
      %s18 = sphi 0, %s22
      %p19 = scmp.ge.s32.totalorder %s18, 4
      %s25 = sphi 0, %s37
      %s26 = sphi 0, %s33
      %s27 = sphi 0, %s25
      %s28 = sphi 0, %s26
      %s29 = sphi 0, %s27
      %s30 = sphi 0, %s28
      %s40 = sphi 0, %s42
      %s43 = sphi 0, %s40
      %s44 = sphi 0, %s43
      %s60 = sphi 0, %s44
      %s64 = sphi 0, %s64
      %s66 = sphi 0, %s64
      %s67 = sphi 0, %s66
      %s81 = sphi 0, %s67
      %s85 = sphi 0, %s85
      %s87 = sphi 0, %s85
      %s88 = sphi 0, %s87
      %s102 = sphi 0, %s88
      %s106 = sphi 0, %s106
      %s108 = sphi 0, %s106
      %s109 = sphi 0, %s108
      %s123 = sphi 0, %s109
      %s127 = sphi 0, %s127
      %s129 = sphi 0, %s127
      %s130 = sphi 0, %s129
      %s144 = sphi 0, %s130
      %s150 = sphi 0, %s152
      %s153 = sphi 0, %s150
      %s154 = sphi 0, %s153
      %s170 = sphi 0, %s154
    $region4: #{tpu_custom_call.1} parent=1 // loop_header_branch
      %21 = sbr.rel (%p19) target = $region8
    $region5: #{tpu_custom_call.1} parent=1 // loop_body
      %s23 = ssub.s32 %s18, 1
      %s24 = ssub.s32 %s18, 2
      %s31 = sadd.s32 1, %s26
      %p32 = scmp.ge.s32.totalorder %s31, 1
      %s33 = scalar_select %p32, 0, %s31
      %s34 = sadd.s32 1, %s25
      %s35 = scalar_select %p32, %s34, %s25
      %p36 = scmp.ge.s32.totalorder %s35, 2
      %s37 = scalar_select %p36, 0, %s35
      %s38 = ssub.s32 %s25, %s37
      %p39 = scmp.eq.s32.totalorder %s38, 0
      %s41 = sadd.s32 %s40, 1
      %s42 = scalar_select %p39, %s40, %s41
      %p45 = pneg %p39
      %p46 = scmp.eq.s32.totalorder %s18, 1
      %p47 = por %p45, %p46
      %p48 = scmp.ne.s32.totalorder %s40, %s43
      %p49 = scmp.eq.s32.totalorder %s18, 0
      %p50 = por %p48, %p49
      %p51 = scmp.ne.s32.totalorder %s40, %s43
      %p52 = scmp.eq.s32.totalorder %s23, 1
      %p53 = por %p51, %p52
      %p54 = scmp.ne.s32.totalorder %s43, %s44
      %p55 = scmp.eq.s32.totalorder %s23, 0
      %p56 = por %p54, %p55
      %p57 = scmp.ne.s32.totalorder %s43, %s44
      %p58 = scmp.eq.s32.totalorder %s24, 1
      %p59 = por %p57, %p58
      %p61 = scmp.ne.s32.totalorder %s44, %s60
      %p62 = scmp.eq.s32.totalorder %s24, 0
      %p63 = por %p61, %p62
      %s65 = sadd.s32 %s64, 1
      %p68 = scmp.eq.s32.totalorder %s18, 1
      %p69 = scmp.ne.s32.totalorder %s64, %s66
      %p70 = scmp.eq.s32.totalorder %s18, 0
      %p71 = por %p69, %p70
      %p72 = scmp.ne.s32.totalorder %s64, %s66
      %p73 = scmp.eq.s32.totalorder %s23, 1
      %p74 = por %p72, %p73
      %p75 = scmp.ne.s32.totalorder %s66, %s67
      %p76 = scmp.eq.s32.totalorder %s23, 0
      %p77 = por %p75, %p76
      %p78 = scmp.ne.s32.totalorder %s66, %s67
      %p79 = scmp.eq.s32.totalorder %s24, 1
      %p80 = por %p78, %p79
      %p82 = scmp.ne.s32.totalorder %s67, %s81
      %p83 = scmp.eq.s32.totalorder %s24, 0
      %p84 = por %p82, %p83
      %s86 = sadd.s32 %s85, 1
      %p89 = scmp.eq.s32.totalorder %s18, 1
      %p90 = scmp.ne.s32.totalorder %s85, %s87
      %p91 = scmp.eq.s32.totalorder %s18, 0
      %p92 = por %p90, %p91
      %p93 = scmp.ne.s32.totalorder %s85, %s87
      %p94 = scmp.eq.s32.totalorder %s23, 1
      %p95 = por %p93, %p94
      %p96 = scmp.ne.s32.totalorder %s87, %s88
      %p97 = scmp.eq.s32.totalorder %s23, 0
      %p98 = por %p96, %p97
      %p99 = scmp.ne.s32.totalorder %s87, %s88
      %p100 = scmp.eq.s32.totalorder %s24, 1
      %p101 = por %p99, %p100
      %p103 = scmp.ne.s32.totalorder %s88, %s102
      %p104 = scmp.eq.s32.totalorder %s24, 0
      %p105 = por %p103, %p104
      %s107 = sadd.s32 %s106, 1
      %p110 = scmp.eq.s32.totalorder %s18, 1
      %p111 = scmp.ne.s32.totalorder %s106, %s108
      %p112 = scmp.eq.s32.totalorder %s18, 0
      %p113 = por %p111, %p112
      %p114 = scmp.ne.s32.totalorder %s106, %s108
      %p115 = scmp.eq.s32.totalorder %s23, 1
      %p116 = por %p114, %p115
      %p117 = scmp.ne.s32.totalorder %s108, %s109
      %p118 = scmp.eq.s32.totalorder %s23, 0
      %p119 = por %p117, %p118
      %p120 = scmp.ne.s32.totalorder %s108, %s109
      %p121 = scmp.eq.s32.totalorder %s24, 1
      %p122 = por %p120, %p121
      %p124 = scmp.ne.s32.totalorder %s109, %s123
      %p125 = scmp.eq.s32.totalorder %s24, 0
      %p126 = por %p124, %p125
      %s128 = sadd.s32 %s127, 1
      %p131 = scmp.eq.s32.totalorder %s18, 1
      %p132 = scmp.ne.s32.totalorder %s127, %s129
      %p133 = scmp.eq.s32.totalorder %s18, 0
      %p134 = por %p132, %p133
      %p135 = scmp.ne.s32.totalorder %s127, %s129
      %p136 = scmp.eq.s32.totalorder %s23, 1
      %p137 = por %p135, %p136
      %p138 = scmp.ne.s32.totalorder %s129, %s130
      %p139 = scmp.eq.s32.totalorder %s23, 0
      %p140 = por %p138, %p139
      %p141 = scmp.ne.s32.totalorder %s129, %s130
      %p142 = scmp.eq.s32.totalorder %s24, 1
      %p143 = por %p141, %p142
      %p145 = scmp.ne.s32.totalorder %s130, %s144
      %p146 = scmp.eq.s32.totalorder %s24, 0
      %p147 = por %p145, %p146
      %s148 = ssub.s32 %s25, %s37
      %p149 = scmp.eq.s32.totalorder %s148, 0
      %s151 = sadd.s32 %s150, 1
      %s152 = scalar_select %p149, %s150, %s151
      %p155 = pneg %p149
      %p156 = scmp.eq.s32.totalorder %s18, 1
      %p157 = por %p155, %p156
      %p158 = scmp.ne.s32.totalorder %s150, %s153
      %p159 = scmp.eq.s32.totalorder %s18, 0
      %p160 = por %p158, %p159
      %p161 = scmp.ne.s32.totalorder %s150, %s153
      %p162 = scmp.eq.s32.totalorder %s23, 1
      %p163 = por %p161, %p162
      %p164 = scmp.ne.s32.totalorder %s153, %s154
      %p165 = scmp.eq.s32.totalorder %s23, 0
      %p166 = por %p164, %p165
      %p167 = scmp.ne.s32.totalorder %s153, %s154
      %p168 = scmp.eq.s32.totalorder %s24, 1
      %p169 = por %p167, %p168
      %p171 = scmp.ne.s32.totalorder %s154, %s170
      %p172 = scmp.eq.s32.totalorder %s24, 0
      %p173 = por %p171, %p172
      %p174 = scmp.le.s32.totalorder 1, %s18
      %p175 = scmp.lt.s32.totalorder %s18, 3
      %p176 = pnand %p174, %p175
      %p177 = pneg %p176
      // Predicated region
      $region9: #{tpu_custom_call.1} parent=5 // pred_check
        _
      $region10: #{tpu_custom_call.1} parent=5 // pred_check_branch
        %179 = sbr.rel (%p176) target = $region12
      $region11: #{tpu_custom_call.1} parent=5 // pred_region
        %s180 = ssub.s32 %s18, 1
        // Predicated region
        $region13: #{tpu_custom_call.1} parent=11 // pred_check
          %p181 = pneg %p77
        $region14: #{tpu_custom_call.1} parent=11 // pred_check_branch
          %183 = sbr.rel (%p181) target = $region16
        $region15: #{tpu_custom_call.1} parent=11 // pred_region
          %s185 = ssub.s32 2048, 2048
          %186 = vsyncadd [#allocation6], %s185
          %s187 = sshll.u32 [#allocation5], 4
          %s188 = int_to_ptr.vmem [resolvable:$true] %s187
          %193 = dma.hbm_to_vmem [thread:$0]  %s1, 2048, %s188, [#allocation6], 128, 128, 8
        $region16: #{tpu_custom_call.1} parent=11 // pred_fallthru
          _
        // Predicated region
        $region17: #{tpu_custom_call.1} parent=11 // pred_check
          %p194 = pneg %p98
        $region18: #{tpu_custom_call.1} parent=11 // pred_check_branch
          %196 = sbr.rel (%p194) target = $region20
        $region19: #{tpu_custom_call.1} parent=11 // pred_region
          _
        $region20: #{tpu_custom_call.1} parent=11 // pred_fallthru
          _
        // Predicated region
        $region21: #{tpu_custom_call.1} parent=11 // pred_check
          %p197 = pneg %p119
        $region22: #{tpu_custom_call.1} parent=11 // pred_check_branch
          %199 = sbr.rel (%p197) target = $region24
        $region23: #{tpu_custom_call.1} parent=11 // pred_region
          %s201 = ssub.s32 2048, 2048
          %202 = vsyncadd [#allocation6], %s201
          %s203 = sshll.u32 [#allocation7], 4
          %s204 = int_to_ptr.vmem [resolvable:$true] %s203
          %209 = dma.hbm_to_vmem [thread:$0]  %s3, 2048, %s204, [#allocation6], 128, 128, 8
        $region24: #{tpu_custom_call.1} parent=11 // pred_fallthru
          _
        // Predicated region
        $region25: #{tpu_custom_call.1} parent=11 // pred_check
          %p210 = pneg %p140
        $region26: #{tpu_custom_call.1} parent=11 // pred_check_branch
          %212 = sbr.rel (%p210) target = $region28
        $region27: #{tpu_custom_call.1} parent=11 // pred_region
          _
        $region28: #{tpu_custom_call.1} parent=11 // pred_fallthru
          _
      $region12: #{tpu_custom_call.1} parent=5 // pred_fallthru
        _
      %p213 = scmp.lt.s32.totalorder %s18, 2
      // Predicated region
      $region29: #{tpu_custom_call.1} parent=5 // pred_check
        %p214 = pneg %p213
      $region30: #{tpu_custom_call.1} parent=5 // pred_check_branch
        %216 = sbr.rel (%p214) target = $region32
      $region31: #{tpu_custom_call.1} parent=5 // pred_region
        // Predicated region
        $region33: #{tpu_custom_call.1} parent=31 // pred_check
          %p217 = pneg %p50
        $region34: #{tpu_custom_call.1} parent=31 // pred_check_branch
          %219 = sbr.rel (%p217) target = $region36
        $region35: #{tpu_custom_call.1} parent=31 // pred_region
          %s220 = sand.u32 %s40, 1
          %s221 = scalar_lea.sflag [#allocation3], %s220
          %s222 = sand.u32 %s40, 1
          %s223 = smul.addr %s222, 8
          %s224 = scalar_lea.vmem [#allocation2], %s223
          %s226 = ssub.s32 128, 128
          %227 = vsyncadd %s221, %s226
          %s228 = smul.addr %s25, 128
          %s229 = scalar_lea.hbm %s0, %s228
          %s231 = sshll.u32 %s224, 4
          %s232 = int_to_ptr.vmem [resolvable:$true] %s231
          %234 = dma.hbm_to_vmem [thread:$0]  %s229, 128, %s232, %s221
        $region36: #{tpu_custom_call.1} parent=31 // pred_fallthru
          _
      $region32: #{tpu_custom_call.1} parent=5 // pred_fallthru
        _
      %p235 = scmp.le.s32.totalorder 1, %s18
      %p236 = scmp.lt.s32.totalorder %s18, 3
      %p237 = pnand %p235, %p236
      %p238 = pneg %p237
      // Predicated region
      $region37: #{tpu_custom_call.1} parent=5 // pred_check
        _
      $region38: #{tpu_custom_call.1} parent=5 // pred_check_branch
        %240 = sbr.rel (%p237) target = $region40
      $region39: #{tpu_custom_call.1} parent=5 // pred_region
        %s241 = ssub.s32 %s18, 1
        %s242 = sand.u32 %s43, 1
        %s243 = scalar_lea.sflag [#allocation3], %s242
        %s244 = sand.u32 %s43, 1
        %s245 = smul.addr %s244, 8
        %s246 = scalar_lea.vmem [#allocation2], %s245
        // Predicated region
        $region41: #{tpu_custom_call.1} parent=39 // pred_check
          %p247 = pneg %p56
        $region42: #{tpu_custom_call.1} parent=39 // pred_check_branch
          %249 = sbr.rel (%p247) target = $region44
        $region43: #{tpu_custom_call.1} parent=39 // pred_region
          %250 = dma.done %s243, 128
        $region44: #{tpu_custom_call.1} parent=39 // pred_fallthru
          _
        // Predicated region
        $region45: #{tpu_custom_call.1} parent=39 // pred_check
          %p251 = pneg %p77
        $region46: #{tpu_custom_call.1} parent=39 // pred_check_branch
          %253 = sbr.rel (%p251) target = $region48
        $region47: #{tpu_custom_call.1} parent=39 // pred_region
          %254 = dma.done [#allocation6], 2048
        $region48: #{tpu_custom_call.1} parent=39 // pred_fallthru
          _
        // Predicated region
        $region49: #{tpu_custom_call.1} parent=39 // pred_check
          %p255 = pneg %p119
        $region50: #{tpu_custom_call.1} parent=39 // pred_check_branch
          %257 = sbr.rel (%p255) target = $region52
        $region51: #{tpu_custom_call.1} parent=39 // pred_region
          %258 = dma.done [#allocation6], 2048
        $region52: #{tpu_custom_call.1} parent=39 // pred_fallthru
          _
        %s259 = sand.u32 %s43, 1
        %s260 = scalar_lea.sflag [#allocation3], %s259
        %s261 = sand.u32 %s43, 1
        %s262 = smul.addr %s261, 8
        %s263 = scalar_lea.vmem [#allocation2], %s262
        %p264 = pneg %p56
        %p265 = pneg %p53
        %p266 = pneg %p77
        %p267 = pneg %p74
        %p268 = pneg %p98
        %p269 = pneg %p95
        %p270 = pneg %p119
        %p271 = pneg %p116
        %p272 = pneg %p140
        %p273 = pneg %p137
        %p274 = pneg %p166
        %p275 = pneg %p163
        %s276 = sand.u32 %s153, 1
        %s277 = scalar_lea.sflag [#allocation4], %s276
        %s278 = sand.u32 %s153, 1
        %s279 = smul.addr %s278, 8
        %s280 = scalar_lea.vmem [#allocation8], %s279
        %p281 = scmp.eq.s32.totalorder %s28, 0
        // Predicated region
        $region53: #{tpu_custom_call.1} parent=39 // pred_check
          %p282 = pneg %p281
        $region54: #{tpu_custom_call.1} parent=39 // pred_check_branch
          %284 = sbr.rel (%p282) target = $region56
        $region55: #{tpu_custom_call.1} parent=39 // pred_region
          %285 = vst [vmem:[%s280] sm:$0xff] 0.0
        $region56: #{tpu_custom_call.1} parent=39 // pred_fallthru
          _
        %s286 = smul.u32 %s28, 128
        %s287 = sshra.s32 %s286, 7
        %s288 = sand.u32 %s286, 127
        %s289 = scalar_lea.vmem [#allocation5], %s287
        %v290 = vld [vmem:[%s289] sm:$0xff]
        %v291 = vld [vmem:[%s289 + $0x8] sm:$0xff]
        %v292 = vld [vmem:[%s289 + $0x10] sm:$0xff]
        %v293 = vld [vmem:[%s289 + $0x18] sm:$0xff]
        %v294 = vld [vmem:[%s289 + $0x20] sm:$0xff]
        %v295 = vld [vmem:[%s289 + $0x28] sm:$0xff]
        %v296 = vld [vmem:[%s289 + $0x30] sm:$0xff]
        %v297 = vld [vmem:[%s289 + $0x38] sm:$0xff]
        %v298 = vld [vmem:[%s289 + $0x40] sm:$0xff]
        %v299 = vld [vmem:[%s289 + $0x48] sm:$0xff]
        %v300 = vld [vmem:[%s289 + $0x50] sm:$0xff]
        %v301 = vld [vmem:[%s289 + $0x58] sm:$0xff]
        %v302 = vld [vmem:[%s289 + $0x60] sm:$0xff]
        %v303 = vld [vmem:[%s289 + $0x68] sm:$0xff]
        %v304 = vld [vmem:[%s289 + $0x70] sm:$0xff]
        %v305 = vld [vmem:[%s289 + $0x78] sm:$0xff]
        %s306 = scalar_lea.vmem %s2, %s287
        %v307 = vld [vmem:[%s306] sm:$0x1]
        %s308 = scalar_lea.vmem [#allocation7], %s286
        %v309 = vld [vmem:[%s308] sm:$0xff]
        %v310 = vld [vmem:[%s308 + $0x8] sm:$0xff]
        %v311 = vld [vmem:[%s308 + $0x10] sm:$0xff]
        %v312 = vld [vmem:[%s308 + $0x18] sm:$0xff]
        %v313 = vld [vmem:[%s308 + $0x20] sm:$0xff]
        %v314 = vld [vmem:[%s308 + $0x28] sm:$0xff]
        %v315 = vld [vmem:[%s308 + $0x30] sm:$0xff]
        %v316 = vld [vmem:[%s308 + $0x38] sm:$0xff]
        %v317 = vld [vmem:[%s308 + $0x40] sm:$0xff]
        %v318 = vld [vmem:[%s308 + $0x48] sm:$0xff]
        %v319 = vld [vmem:[%s308 + $0x50] sm:$0xff]
        %v320 = vld [vmem:[%s308 + $0x58] sm:$0xff]
        %v321 = vld [vmem:[%s308 + $0x60] sm:$0xff]
        %v322 = vld [vmem:[%s308 + $0x68] sm:$0xff]
        %v323 = vld [vmem:[%s308 + $0x70] sm:$0xff]
        %v324 = vld [vmem:[%s308 + $0x78] sm:$0xff]
        %v325 = vld [vmem:[%s246] sm:$0xff]
        %v327 = vlaneseq
        %v328 = vshrl.u32 %v327, 7
        %v329 = vsub.s32 0, %v328
        %v330 = vrot.slane %v307, %v329
        %332 = vmatprep.subr.mxu0 0.0
        %333 = vmatpush1.msra.mxu0 %v305
        %334 = vmatprep.subr.mxu0 0.0
        %335 = vmatpush1.msra.mxu0 %v304
        %336 = vmatprep.subr.mxu0 0.0
        %337 = vmatpush1.msra.mxu0 %v303
        %338 = vmatprep.subr.mxu0 0.0
        %339 = vmatpush1.msra.mxu0 %v302
        %340 = vmatprep.subr.mxu0 0.0
        %341 = vmatpush1.msra.mxu0 %v301
        %342 = vmatprep.subr.mxu0 0.0
        %343 = vmatpush1.msra.mxu0 %v300
        %344 = vmatprep.subr.mxu0 0.0
        %345 = vmatpush1.msra.mxu0 %v299
        %346 = vmatprep.subr.mxu0 0.0
        %347 = vmatpush1.msra.mxu0 %v298
        %348 = vmatprep.subr.mxu0 0.0
        %349 = vmatpush1.msra.mxu0 %v297
        %350 = vmatprep.subr.mxu0 0.0
        %351 = vmatpush1.msra.mxu0 %v296
        %352 = vmatprep.subr.mxu0 0.0
        %353 = vmatpush1.msra.mxu0 %v295
        %354 = vmatprep.subr.mxu0 0.0
        %355 = vmatpush1.msra.mxu0 %v294
        %356 = vmatprep.subr.mxu0 0.0
        %357 = vmatpush1.msra.mxu0 %v293
        %358 = vmatprep.subr.mxu0 0.0
        %359 = vmatpush1.msra.mxu0 %v292
        %360 = vmatprep.subr.mxu0 0.0
        %361 = vmatpush1.msra.mxu0 %v291
        %362 = vmatprep.subr.mxu0 0.0
        %363 = vmatpush1.msra.mxu0 %v290
        %364 = vmatprep.subr.mxu0 0.0
        %365 = vmatpush2.msra.mxu0 0.0
        %366 = vmatprep.subr.mxu0 0.0
        %367 = vmatpush2.msra.mxu0 0.0
        %368 = vmatprep.subr.mxu0 0.0
        %369 = vmatpush2.msra.mxu0 0.0
        %370 = vmatprep.subr.mxu0 0.0
        %371 = vmatpush2.msra.mxu0 0.0
        %372 = vmatprep.subr.mxu0 0.0
        %373 = vmatpush2.msra.mxu0 0.0
        %374 = vmatprep.subr.mxu0 0.0
        %375 = vmatpush2.msra.mxu0 0.0
        %376 = vmatprep.subr.mxu0 0.0
        %377 = vmatpush2.msra.mxu0 0.0
        %378 = vmatprep.subr.mxu0 0.0
        %379 = vmatpush2.msra.mxu0 0.0
        %380 = vmatprep.subr.mxu0 0.0
        %381 = vmatpush2.msra.mxu0 0.0
        %382 = vmatprep.subr.mxu0 0.0
        %383 = vmatpush2.msra.mxu0 0.0
        %384 = vmatprep.subr.mxu0 0.0
        %385 = vmatpush2.msra.mxu0 0.0
        %386 = vmatprep.subr.mxu0 0.0
        %387 = vmatpush2.msra.mxu0 0.0
        %388 = vmatprep.subr.mxu0 0.0
        %389 = vmatpush2.msra.mxu0 0.0
        %390 = vmatprep.subr.mxu0 0.0
        %391 = vmatpush2.msra.mxu0 0.0
        %392 = vmatprep.subr.mxu0 0.0
        %393 = vmatpush2.msra.mxu0 0.0
        %394 = vmatprep.subr.mxu0 0.0
        %395 = vmatpush2.msra.mxu0 0.0
        %396 = vmatprep.mubr.f32.mxu0 0.0
        %397 = vmatmul.mubr.f32.gmra.mxu0 %v325
        %v398 = vpop.f32.mrf.mxu0
        %v399 = vadd.f32 %v330, %v398
        %v400 = vpop.f32.mrf.mxu0
        %401 = vdwg.mxu0
        %v402 = vmax.f32 %v399, 0.0
        %v403 = vld [vmem:[%s280] sm:$0xff]
        %404 = vmatprep.subr.mxu0 0.0
        %405 = vmatpush1.msra.mxu0 %v324
        %406 = vmatprep.subr.mxu0 0.0
        %407 = vmatpush1.msra.mxu0 %v323
        %408 = vmatprep.subr.mxu0 0.0
        %409 = vmatpush1.msra.mxu0 %v322
        %410 = vmatprep.subr.mxu0 0.0
        %411 = vmatpush1.msra.mxu0 %v321
        %412 = vmatprep.subr.mxu0 0.0
        %413 = vmatpush1.msra.mxu0 %v320
        %414 = vmatprep.subr.mxu0 0.0
        %415 = vmatpush1.msra.mxu0 %v319
        %416 = vmatprep.subr.mxu0 0.0
        %417 = vmatpush1.msra.mxu0 %v318
        %418 = vmatprep.subr.mxu0 0.0
        %419 = vmatpush1.msra.mxu0 %v317
        %420 = vmatprep.subr.mxu0 0.0
        %421 = vmatpush1.msra.mxu0 %v316
        %422 = vmatprep.subr.mxu0 0.0
        %423 = vmatpush1.msra.mxu0 %v315
        %424 = vmatprep.subr.mxu0 0.0
        %425 = vmatpush1.msra.mxu0 %v314
        %426 = vmatprep.subr.mxu0 0.0
        %427 = vmatpush1.msra.mxu0 %v313
        %428 = vmatprep.subr.mxu0 0.0
        %429 = vmatpush1.msra.mxu0 %v312
        %430 = vmatprep.subr.mxu0 0.0
        %431 = vmatpush1.msra.mxu0 %v311
        %432 = vmatprep.subr.mxu0 0.0
        %433 = vmatpush1.msra.mxu0 %v310
        %434 = vmatprep.subr.mxu0 0.0
        %435 = vmatpush1.msra.mxu0 %v309
        %436 = vmatprep.subr.mxu0 0.0
        %437 = vmatpush2.msra.mxu0 0.0
        %438 = vmatprep.subr.mxu0 0.0
        %439 = vmatpush2.msra.mxu0 0.0
        %440 = vmatprep.subr.mxu0 0.0
        %441 = vmatpush2.msra.mxu0 0.0
        %442 = vmatprep.subr.mxu0 0.0
        %443 = vmatpush2.msra.mxu0 0.0
        %444 = vmatprep.subr.mxu0 0.0
        %445 = vmatpush2.msra.mxu0 0.0
        %446 = vmatprep.subr.mxu0 0.0
        %447 = vmatpush2.msra.mxu0 0.0
        %448 = vmatprep.subr.mxu0 0.0
        %449 = vmatpush2.msra.mxu0 0.0
        %450 = vmatprep.subr.mxu0 0.0
        %451 = vmatpush2.msra.mxu0 0.0
        %452 = vmatprep.subr.mxu0 0.0
        %453 = vmatpush2.msra.mxu0 0.0
        %454 = vmatprep.subr.mxu0 0.0
        %455 = vmatpush2.msra.mxu0 0.0
        %456 = vmatprep.subr.mxu0 0.0
        %457 = vmatpush2.msra.mxu0 0.0
        %458 = vmatprep.subr.mxu0 0.0
        %459 = vmatpush2.msra.mxu0 0.0
        %460 = vmatprep.subr.mxu0 0.0
        %461 = vmatpush2.msra.mxu0 0.0
        %462 = vmatprep.subr.mxu0 0.0
        %463 = vmatpush2.msra.mxu0 0.0
        %464 = vmatprep.subr.mxu0 0.0
        %465 = vmatpush2.msra.mxu0 0.0
        %466 = vmatprep.subr.mxu0 0.0
        %467 = vmatpush2.msra.mxu0 0.0
        %468 = vmatprep.mubr.f32.mxu0 0.0
        %469 = vmatmul.mubr.f32.gmra.mxu0 %v402
        %v470 = vpop.f32.mrf.mxu0
        %v471 = vadd.f32 0.0, %v470
        %v472 = vpop.f32.mrf.mxu0
        %473 = vdwg.mxu0
        %v474 = vadd.f32 %v403, %v471
        %475 = vst [vmem:[%s280] sm:$0xff] %v474
        // Predicated region
        $region57: #{tpu_custom_call.1} parent=39 // pred_check
          %p476 = pneg %p281
        $region58: #{tpu_custom_call.1} parent=39 // pred_check_branch
          %478 = sbr.rel (%p476) target = $region60
        $region59: #{tpu_custom_call.1} parent=39 // pred_region
          %v479 = vld [vmem:[%s280] sm:$0xff]
          %v480 = vld [vmem:[%s4] sm:$0x1]
          %v482 = vlaneseq
          %v483 = vshrl.u32 %v482, 7
          %v484 = vsub.s32 0, %v483
          %v485 = vrot.slane %v480, %v484
          %v487 = vadd.f32 %v479, %v485
          %488 = vst [vmem:[%s280] sm:$0xff] %v487
        $region60: #{tpu_custom_call.1} parent=39 // pred_fallthru
          _
        %s489 = sand.u32 %s153, 1
        %s490 = scalar_lea.sflag [#allocation4], %s489
        %s491 = sand.u32 %s153, 1
        %s492 = smul.addr %s491, 8
        %s493 = scalar_lea.vmem [#allocation8], %s492
        // Predicated region
        $region61: #{tpu_custom_call.1} parent=39 // pred_check
          %p494 = pneg %p163
        $region62: #{tpu_custom_call.1} parent=39 // pred_check_branch
          %496 = sbr.rel (%p494) target = $region64
        $region63: #{tpu_custom_call.1} parent=39 // pred_region
          %s498 = ssub.s32 128, 128
          %499 = vsyncadd %s490, %s498
          %s500 = smul.addr %s27, 128
          %s501 = scalar_lea.hbm %s5, %s500
          %s503 = sshll.u32 %s493, 4
          %s504 = int_to_ptr.vmem [resolvable:$true] %s503
          %506 = dma.vmem_to_hbm [thread:$0]  %s504, 128, %s501, %s490
        $region64: #{tpu_custom_call.1} parent=39 // pred_fallthru
          _
      $region40: #{tpu_custom_call.1} parent=5 // pred_fallthru
        _
      %p507 = scmp.le.s32.totalorder 2, %s18
      // Predicated region
      $region65: #{tpu_custom_call.1} parent=5 // pred_check
        %p508 = pneg %p507
      $region66: #{tpu_custom_call.1} parent=5 // pred_check_branch
        %510 = sbr.rel (%p508) target = $region68
      $region67: #{tpu_custom_call.1} parent=5 // pred_region
        %s511 = ssub.s32 %s18, 2
        // Predicated region
        $region69: #{tpu_custom_call.1} parent=67 // pred_check
          %p512 = pneg %p169
        $region70: #{tpu_custom_call.1} parent=67 // pred_check_branch
          %514 = sbr.rel (%p512) target = $region72
        $region71: #{tpu_custom_call.1} parent=67 // pred_region
          %s515 = sand.u32 %s154, 1
          %s516 = scalar_lea.sflag [#allocation4], %s515
          %s517 = sand.u32 %s154, 1
          %s518 = smul.addr %s517, 8
          %s519 = scalar_lea.vmem [#allocation8], %s518
          %520 = dma.done %s516, 128
        $region72: #{tpu_custom_call.1} parent=67 // pred_fallthru
          _
      $region68: #{tpu_custom_call.1} parent=5 // pred_fallthru
        _
    $region6: #{tpu_custom_call.1} parent=1 // loop_footer
      %s22 = sadd.s32 1, %s18
    $region7: #{tpu_custom_call.1} parent=1 // loop_footer_branch
      %17 = sbr.rel target = $region3
    $region8: #{tpu_custom_call.1} parent=1 // loop_exit
      _
    %521 = vsyncpa [#allocation3], 1
    %s522 = scalar_lea.sflag [#allocation3], 1
    %523 = vsyncpa %s522, 1
    %524 = vsyncpa [#allocation6], 1
    %525 = vsyncpa [#allocation4], 1
    %s526 = scalar_lea.sflag [#allocation4], 1
    %527 = vsyncpa %s526, 1

</llo_original>
